<compile_context>
chip_gen: v6e
topology: v6e:2x2x1
jax: 0.10.0
libtpu: 0.0.40
codegen_flags: <defaults>
</compile_context>

<pallas_src>
import functools
import math

import jax
import jax.numpy as jnp
from jax.experimental import pallas as pl
from jax.experimental.pallas import tpu as pltpu

BATCH = 2
IN_CHANNELS = 4
MID_CHANNELS = 8
OUT_CHANNELS = 8
HEIGHT = 16
WIDTH = 16
GN_EPS = 1e-5


def _gelu_tanh(x):
    # tanh-approximate GELU: max abs error ~1e-3 vs exact-erf GELU -> well
    # inside the 2e-2 test tolerance; tanh goes to the EUP slot.
    c = math.sqrt(2.0 / math.pi)
    return 0.5 * x * (1.0 + jnp.tanh(c * (x + 0.044715 * (x * x * x))))


def _make_taps(nb, height, width):
    """Static (token shift, validity mask) per 3x3 tap over the fused B*S axis.

    The mask zeroes every output token whose source (row+oy, col+ox) falls
    outside its own image, which also kills any roll wrap-around across the
    image seam / slab ends.
    """
    seq = height * width
    n_tok = nb * seq
    log2w = width.bit_length() - 1
    t = jax.lax.broadcasted_iota(jnp.int32, (1, n_tok), 1)
    p = jnp.bitwise_and(t, seq - 1)             # token index within its image
    col = jnp.bitwise_and(p, width - 1)
    row = jnp.right_shift(p, log2w)
    taps = []
    for ky in range(3):
        for kx in range(3):
            oy, ox = ky - 1, kx - 1
            d = oy * width + ox
            conds = []
            if oy == -1:
                conds.append(row >= 1)
            elif oy == 1:
                conds.append(row <= height - 2)
            if ox == -1:
                conds.append(col >= 1)
            elif ox == 1:
                conds.append(col <= width - 2)
            if conds:
                m = conds[0]
                for extra in conds[1:]:
                    m = jnp.logical_and(m, extra)
                mask = m.astype(jnp.float32)
            else:
                mask = None                      # center tap: always valid
            taps.append((d, mask))
    return taps


def _conv3x3_im2col(x, w_mat, taps, n_tok):
    """x: (C_in, N); w_mat: (C_out, 9*C_in) tap-major -> (C_out, N) in f32."""
    cols = []
    for d, mask in taps:
        s = x if d == 0 else pltpu.roll(x, shift=(-d) % n_tok, axis=1)
        if mask is not None:
            s = s * mask
        cols.append(s)
    stacked = jnp.concatenate(cols, axis=0)      # (9*C_in, N) sublane stack
    return jnp.dot(w_mat, stacked, preferred_element_type=jnp.float32)


def _group_norm1(y, gamma, beta, nb, seq):
    """GroupNorm(num_groups=1) per image over a lane-fused (C, nb*seq) slab."""
    outs = []
    for b in range(nb):
        yb = y[:, b * seq:(b + 1) * seq]         # 128-aligned lane slice
        mu = jnp.mean(yb, keepdims=True)         # (1, 1)
        var = jnp.mean(yb * yb, keepdims=True) - mu * mu
        inv = jax.lax.rsqrt(var + GN_EPS)
        scale = inv * gamma                      # (C, 1) folded affine
        bias = beta - mu * scale                 # (C, 1)
        outs.append(yb * scale + bias)           # 1 mul + 1 add per element
    return outs[0] if nb == 1 else jnp.concatenate(outs, axis=1)


def double_conv_kernel(x_ref, w1_ref, g1_ref, b1_ref, w2_ref, g2_ref, b2_ref,
                       o_ref, *, nb, height, width, residual):
    seq = height * width
    n_tok = nb * seq
    taps = _make_taps(nb, height, width)         # built once, reused by both convs

    x = x_ref[...]                               # (C_in, N), lane-dense
    y = _conv3x3_im2col(x, w1_ref[...], taps, n_tok)       # (C_mid, N)
    y = _group_norm1(y, g1_ref[...], b1_ref[...], nb, seq)
    y = _gelu_tanh(y)
    y = _conv3x3_im2col(y, w2_ref[...], taps, n_tok)       # (C_out, N)
    y = _group_norm1(y, g2_ref[...], b2_ref[...], nb, seq)
    if residual:
        y = _gelu_tanh(x + y)
    o_ref[...] = y


def double_conv(x, params, *, residual=False):
    """x: (B, C_in, H, W) float32 -> (B, C_out, H, W) float32."""
    w1, g1, b1, w2, g2, b2 = params
    B, C_in, H, W = x.shape
    assert W & (W - 1) == 0 and H & (H - 1) == 0, "H, W must be powers of two"
    C_mid, C_out = w1.shape[0], w2.shape[0]
    if residual:
        assert C_in == C_out, "residual path needs in_channels == out_channels"
    N = B * H * W

    # One-time wrapper-side layout plumbing (outside the kernel):
    #   weights OIHW -> tap-major (C_out, 9*C_in), columns ordered tap*C_in+c_in
    #   to match the kernel's sublane stacking order.
    w1_m = jnp.transpose(w1, (0, 2, 3, 1)).reshape(C_mid, 9 * C_in)
    w2_m = jnp.transpose(w2, (0, 2, 3, 1)).reshape(C_out, 9 * C_mid)
    g1c, b1c = g1.reshape(C_mid, 1), b1.reshape(C_mid, 1)
    g2c, b2c = g2.reshape(C_out, 1), b2.reshape(C_out, 1)
    #   activations (B, C, H, W) -> channel-major (C, B*H*W): lanes = tokens,
    #   batch fused into the lane axis (512 lanes -> unmasked vst stores).
    x_cs = jnp.transpose(x, (1, 0, 2, 3)).reshape(C_in, N)

    kernel = functools.partial(double_conv_kernel, nb=B, height=H, width=W,
                               residual=residual)

    def rep(shape):
        n = len(shape)
        return pl.BlockSpec(shape, lambda i, _n=n: (0,) * _n)

    out = pl.pallas_call(
        kernel,
        out_shape=jax.ShapeDtypeStruct((C_out, N), jnp.float32),
        grid=(1,),                                # one step on every generation
        in_specs=[rep((C_in, N)),
                  rep(w1_m.shape), rep(g1c.shape), rep(b1c.shape),
                  rep(w2_m.shape), rep(g2c.shape), rep(b2c.shape)],
        out_specs=rep((C_out, N)),
        compiler_params=pltpu.CompilerParams(
            dimension_semantics=("arbitrary",)),
    )(x_cs, w1_m, g1c, b1c, w2_m, g2c, b2c)

    return jnp.transpose(out.reshape(C_out, B, H, W), (1, 0, 2, 3))


def double_conv_reference(x, params, *, residual=False):
    """Pure-JAX reference matching the PyTorch module (exact-erf GELU)."""
    w1, g1, b1, w2, g2, b2 = params

    def conv(v, w):
        return jax.lax.conv_general_dilated(
            v, w, window_strides=(1, 1), padding="SAME",
            dimension_numbers=("NCHW", "OIHW", "NCHW"),
            precision=jax.lax.Precision.HIGHEST)

    def gn(v, g, b):
        mu = jnp.mean(v, axis=(1, 2, 3), keepdims=True)
        var = jnp.mean((v - mu) ** 2, axis=(1, 2, 3), keepdims=True)
        vn = (v - mu) / jnp.sqrt(var + GN_EPS)
        return vn * g.reshape(1, -1, 1, 1) + b.reshape(1, -1, 1, 1)

    y = conv(x, w1)
    y = gn(y, g1, b1)
    y = jax.nn.gelu(y, approximate=False)
    y = conv(y, w2)
    y = gn(y, g2, b2)
    if residual:
        y = jax.nn.gelu(x + y, approximate=False)
    return y


def init_params(key, c_in, c_mid, c_out):
    k1, k2, k3, k4, k5, k6 = jax.random.split(key, 6)
    s1 = 1.0 / math.sqrt(c_in * 9)
    s2 = 1.0 / math.sqrt(c_mid * 9)
    w1 = s1 * jax.random.normal(k1, (c_mid, c_in, 3, 3), jnp.float32)
    w2 = s2 * jax.random.normal(k2, (c_out, c_mid, 3, 3), jnp.float32)
    g1 = 1.0 + 0.1 * jax.random.normal(k3, (c_mid,), jnp.float32)
    b1 = 0.1 * jax.random.normal(k4, (c_mid,), jnp.float32)
    g2 = 1.0 + 0.1 * jax.random.normal(k5, (c_out,), jnp.float32)
    b2 = 0.1 * jax.random.normal(k6, (c_out,), jnp.float32)
    return (w1, g1, b1, w2, g2, b2)


if __name__ == "__main__":
    key = jax.random.PRNGKey(0)
    k_x, k_p, k_xr, k_pr = jax.random.split(key, 4)

    # Default path: DoubleConv(4 -> 8), residual=False.
    x = jax.random.normal(k_x, (BATCH, IN_CHANNELS, HEIGHT, WIDTH), jnp.float32)
    params = init_params(k_p, IN_CHANNELS, MID_CHANNELS, OUT_CHANNELS)
    y = jax.block_until_ready(double_conv(x, params, residual=False))
    assert y.shape == (BATCH, OUT_CHANNELS, HEIGHT, WIDTH)
    assert y.dtype == jnp.float32
    assert bool(jnp.all(jnp.isfinite(y)))
    y_ref = double_conv_reference(x, params, residual=False)
    assert bool(jnp.allclose(y, y_ref, atol=2e-2, rtol=2e-2))

    # Residual path: DoubleConv(8 -> 8, residual=True).
    xr = jax.random.normal(k_xr, (BATCH, OUT_CHANNELS, HEIGHT, WIDTH), jnp.float32)
    params_r = init_params(k_pr, OUT_CHANNELS, OUT_CHANNELS, OUT_CHANNELS)
    yr = jax.block_until_ready(double_conv(xr, params_r, residual=True))
    yr_ref = double_conv_reference(xr, params_r, residual=True)
    assert bool(jnp.allclose(yr, yr_ref, atol=2e-2, rtol=2e-2))

    print("KERNEL_OK")
</pallas_src>

<mosaic_0001>
module attributes {stable_mosaic.version = 11 : i64} {
  func.func @double_conv_kernel(%arg0: i32, %arg1: memref<4x512xf32, #tpu.memory_space<vmem>>, %arg2: memref<8x36xf32, #tpu.memory_space<vmem>>, %arg3: memref<8x1xf32, #tpu.memory_space<vmem>>, %arg4: memref<8x1xf32, #tpu.memory_space<vmem>>, %arg5: memref<8x72xf32, #tpu.memory_space<vmem>>, %arg6: memref<8x1xf32, #tpu.memory_space<vmem>>, %arg7: memref<8x1xf32, #tpu.memory_space<vmem>>, %arg8: memref<8x512xf32, #tpu.memory_space<vmem>>) attributes {dimension_semantics = [#tpu.dimension_semantics<arbitrary>], iteration_bounds = array<i64: 1>, scalar_prefetch = 0 : i64, scratch_operands = 0 : i64, tpu.core_type = #tpu.core_type<tc>, window_params = [{pipeline_mode = #tpu.pipeline_mode<synchronous>, transform_indices = @transform_0, window_bounds = array<i64: 4, 512>}, {pipeline_mode = #tpu.pipeline_mode<synchronous>, transform_indices = @transform_1, window_bounds = array<i64: 8, 36>}, {pipeline_mode = #tpu.pipeline_mode<synchronous>, transform_indices = @transform_2, window_bounds = array<i64: 8, 1>}, {pipeline_mode = #tpu.pipeline_mode<synchronous>, transform_indices = @transform_3, window_bounds = array<i64: 8, 1>}, {pipeline_mode = #tpu.pipeline_mode<synchronous>, transform_indices = @transform_4, window_bounds = array<i64: 8, 72>}, {pipeline_mode = #tpu.pipeline_mode<synchronous>, transform_indices = @transform_5, window_bounds = array<i64: 8, 1>}, {pipeline_mode = #tpu.pipeline_mode<synchronous>, transform_indices = @transform_6, window_bounds = array<i64: 8, 1>}, {pipeline_mode = #tpu.pipeline_mode<synchronous>, transform_indices = @transform_7, window_bounds = array<i64: 8, 512>}]} {
    %0 = tpu.iota {dimensions = array<i32: 1>} : vector<1x512xi32>
    %c255_i32 = arith.constant 255 : i32
    %1 = vector.broadcast %c255_i32 : i32 to vector<1x512xi32>
    %2 = arith.andi %0, %1 : vector<1x512xi32>
    %c15_i32 = arith.constant 15 : i32
    %3 = vector.broadcast %c15_i32 : i32 to vector<1x512xi32>
    %4 = arith.andi %2, %3 : vector<1x512xi32>
    %c4_i32 = arith.constant 4 : i32
    %5 = vector.broadcast %c4_i32 : i32 to vector<1x512xi32>
    %6 = arith.shrsi %2, %5 : vector<1x512xi32>
    %c1_i32 = arith.constant 1 : i32
    %7 = vector.broadcast %c1_i32 : i32 to vector<1x512xi32>
    %8 = arith.cmpi sge, %6, %7 : vector<1x512xi32>
    %c1_i32_0 = arith.constant 1 : i32
    %9 = vector.broadcast %c1_i32_0 : i32 to vector<1x512xi32>
    %10 = arith.cmpi sge, %4, %9 : vector<1x512xi32>
    %11 = arith.andi %8, %10 : vector<1x512xi1>
    %12 = arith.extui %11 : vector<1x512xi1> to vector<1x512xi32>
    %13 = arith.sitofp %12 : vector<1x512xi32> to vector<1x512xf32>
    %c1_i32_1 = arith.constant 1 : i32
    %14 = vector.broadcast %c1_i32_1 : i32 to vector<1x512xi32>
    %15 = arith.cmpi sge, %6, %14 : vector<1x512xi32>
    %16 = arith.extui %15 : vector<1x512xi1> to vector<1x512xi32>
    %17 = arith.sitofp %16 : vector<1x512xi32> to vector<1x512xf32>
    %c1_i32_2 = arith.constant 1 : i32
    %18 = vector.broadcast %c1_i32_2 : i32 to vector<1x512xi32>
    %19 = arith.cmpi sge, %6, %18 : vector<1x512xi32>
    %c14_i32 = arith.constant 14 : i32
    %20 = vector.broadcast %c14_i32 : i32 to vector<1x512xi32>
    %21 = arith.cmpi sle, %4, %20 : vector<1x512xi32>
    %22 = arith.andi %19, %21 : vector<1x512xi1>
    %23 = arith.extui %22 : vector<1x512xi1> to vector<1x512xi32>
    %24 = arith.sitofp %23 : vector<1x512xi32> to vector<1x512xf32>
    %c1_i32_3 = arith.constant 1 : i32
    %25 = vector.broadcast %c1_i32_3 : i32 to vector<1x512xi32>
    %26 = arith.cmpi sge, %4, %25 : vector<1x512xi32>
    %27 = arith.extui %26 : vector<1x512xi1> to vector<1x512xi32>
    %28 = arith.sitofp %27 : vector<1x512xi32> to vector<1x512xf32>
    %c14_i32_4 = arith.constant 14 : i32
    %29 = vector.broadcast %c14_i32_4 : i32 to vector<1x512xi32>
    %30 = arith.cmpi sle, %4, %29 : vector<1x512xi32>
    %31 = arith.extui %30 : vector<1x512xi1> to vector<1x512xi32>
    %32 = arith.sitofp %31 : vector<1x512xi32> to vector<1x512xf32>
    %c14_i32_5 = arith.constant 14 : i32
    %33 = vector.broadcast %c14_i32_5 : i32 to vector<1x512xi32>
    %34 = arith.cmpi sle, %6, %33 : vector<1x512xi32>
    %c1_i32_6 = arith.constant 1 : i32
    %35 = vector.broadcast %c1_i32_6 : i32 to vector<1x512xi32>
    %36 = arith.cmpi sge, %4, %35 : vector<1x512xi32>
    %37 = arith.andi %34, %36 : vector<1x512xi1>
    %38 = arith.extui %37 : vector<1x512xi1> to vector<1x512xi32>
    %39 = arith.sitofp %38 : vector<1x512xi32> to vector<1x512xf32>
    %c14_i32_7 = arith.constant 14 : i32
    %40 = vector.broadcast %c14_i32_7 : i32 to vector<1x512xi32>
    %41 = arith.cmpi sle, %6, %40 : vector<1x512xi32>
    %42 = arith.extui %41 : vector<1x512xi1> to vector<1x512xi32>
    %43 = arith.sitofp %42 : vector<1x512xi32> to vector<1x512xf32>
    %c14_i32_8 = arith.constant 14 : i32
    %44 = vector.broadcast %c14_i32_8 : i32 to vector<1x512xi32>
    %45 = arith.cmpi sle, %6, %44 : vector<1x512xi32>
    %c14_i32_9 = arith.constant 14 : i32
    %46 = vector.broadcast %c14_i32_9 : i32 to vector<1x512xi32>
    %47 = arith.cmpi sle, %4, %46 : vector<1x512xi32>
    %48 = arith.andi %45, %47 : vector<1x512xi1>
    %49 = arith.extui %48 : vector<1x512xi1> to vector<1x512xi32>
    %50 = arith.sitofp %49 : vector<1x512xi32> to vector<1x512xf32>
    %c0 = arith.constant 0 : index
    %c0_10 = arith.constant 0 : index
    %51 = vector.load %arg1[%c0, %c0_10] : memref<4x512xf32, #tpu.memory_space<vmem>>, vector<4x512xf32>
    %c0_11 = arith.constant 0 : index
    %c0_12 = arith.constant 0 : index
    %52 = vector.load %arg2[%c0_11, %c0_12] : memref<8x36xf32, #tpu.memory_space<vmem>>, vector<8x36xf32>
    %c17_i32 = arith.constant 17 : i32
    %53 = tpu.dynamic_rotate %51 by %c17_i32 dim 1 : vector<4x512xf32>, i32 -> vector<4x512xf32>
    %54 = vector.broadcast %13 : vector<1x512xf32> to vector<4x512xf32>
    %55 = arith.mulf %53, %54 : vector<4x512xf32>
    %c16_i32 = arith.constant 16 : i32
    %56 = tpu.dynamic_rotate %51 by %c16_i32 dim 1 : vector<4x512xf32>, i32 -> vector<4x512xf32>
    %57 = vector.broadcast %17 : vector<1x512xf32> to vector<4x512xf32>
    %58 = arith.mulf %56, %57 : vector<4x512xf32>
    %c15_i32_13 = arith.constant 15 : i32
    %59 = tpu.dynamic_rotate %51 by %c15_i32_13 dim 1 : vector<4x512xf32>, i32 -> vector<4x512xf32>
    %60 = vector.broadcast %24 : vector<1x512xf32> to vector<4x512xf32>
    %61 = arith.mulf %59, %60 : vector<4x512xf32>
    %c1_i32_14 = arith.constant 1 : i32
    %62 = tpu.dynamic_rotate %51 by %c1_i32_14 dim 1 : vector<4x512xf32>, i32 -> vector<4x512xf32>
    %63 = vector.broadcast %28 : vector<1x512xf32> to vector<4x512xf32>
    %64 = arith.mulf %62, %63 : vector<4x512xf32>
    %c511_i32 = arith.constant 511 : i32
    %65 = tpu.dynamic_rotate %51 by %c511_i32 dim 1 : vector<4x512xf32>, i32 -> vector<4x512xf32>
    %66 = vector.broadcast %32 : vector<1x512xf32> to vector<4x512xf32>
    %67 = arith.mulf %65, %66 : vector<4x512xf32>
    %c497_i32 = arith.constant 497 : i32
    %68 = tpu.dynamic_rotate %51 by %c497_i32 dim 1 : vector<4x512xf32>, i32 -> vector<4x512xf32>
    %69 = vector.broadcast %39 : vector<1x512xf32> to vector<4x512xf32>
    %70 = arith.mulf %68, %69 : vector<4x512xf32>
    %c496_i32 = arith.constant 496 : i32
    %71 = tpu.dynamic_rotate %51 by %c496_i32 dim 1 : vector<4x512xf32>, i32 -> vector<4x512xf32>
    %72 = vector.broadcast %43 : vector<1x512xf32> to vector<4x512xf32>
    %73 = arith.mulf %71, %72 : vector<4x512xf32>
    %c495_i32 = arith.constant 495 : i32
    %74 = tpu.dynamic_rotate %51 by %c495_i32 dim 1 : vector<4x512xf32>, i32 -> vector<4x512xf32>
    %75 = vector.broadcast %50 : vector<1x512xf32> to vector<4x512xf32>
    %76 = arith.mulf %74, %75 : vector<4x512xf32>
    %77 = tpu.concatenate %55, %58, %61, %64, %51, %67, %70, %73, %76 in 0 : vector<4x512xf32>, vector<4x512xf32>, vector<4x512xf32>, vector<4x512xf32>, vector<4x512xf32>, vector<4x512xf32>, vector<4x512xf32>, vector<4x512xf32>, vector<4x512xf32> -> vector<36x512xf32>
    %cst = arith.constant dense<0.000000e+00> : vector<8x512xf32>
    %78 = tpu.matmul %52, %77, %cst {dimension_numbers = #tpu.dot_dimension_numbers<[1], [0], [0], [1], [0, 0, 1, 1], [], []>} : vector<8x36xf32>, vector<36x512xf32>, vector<8x512xf32> -> vector<8x512xf32>
    %c0_15 = arith.constant 0 : index
    %c0_16 = arith.constant 0 : index
    %79 = vector.load %arg3[%c0_15, %c0_16] : memref<8x1xf32, #tpu.memory_space<vmem>>, vector<8x1xf32>
    %c0_17 = arith.constant 0 : index
    %c0_18 = arith.constant 0 : index
    %80 = vector.load %arg4[%c0_17, %c0_18] : memref<8x1xf32, #tpu.memory_space<vmem>>, vector<8x1xf32>
    %81 = vector.extract_strided_slice %78 {offsets = [0, 0], sizes = [8, 256], strides = [1, 1]} : vector<8x512xf32> to vector<8x256xf32>
    %82 = vector.shape_cast %81 : vector<8x256xf32> to vector<1x8x256xf32>
    %cst_19 = arith.constant dense<0.000000e+00> : vector<1xf32>
    %83 = vector.multi_reduction <add>, %82, %cst_19 [1, 2] : vector<1x8x256xf32> to vector<1xf32>
    %84 = vector.shape_cast %83 : vector<1xf32> to vector<1x1x1xf32>
    %85 = vector.extract %84[0, 0, 0] : f32 from vector<1x1x1xf32>
    %86 = vector.broadcast %85 : f32 to vector<1x1xf32>
    %cst_20 = arith.constant 2.048000e+03 : f32
    %87 = vector.broadcast %cst_20 : f32 to vector<1x1xf32>
    %88 = arith.divf %86, %87 : vector<1x1xf32>
    %89 = arith.mulf %81, %81 : vector<8x256xf32>
    %90 = vector.shape_cast %89 : vector<8x256xf32> to vector<1x8x256xf32>
    %cst_21 = arith.constant dense<0.000000e+00> : vector<1xf32>
    %91 = vector.multi_reduction <add>, %90, %cst_21 [1, 2] : vector<1x8x256xf32> to vector<1xf32>
    %92 = vector.shape_cast %91 : vector<1xf32> to vector<1x1x1xf32>
    %93 = vector.extract %92[0, 0, 0] : f32 from vector<1x1x1xf32>
    %94 = vector.broadcast %93 : f32 to vector<1x1xf32>
    %cst_22 = arith.constant 2.048000e+03 : f32
    %95 = vector.broadcast %cst_22 : f32 to vector<1x1xf32>
    %96 = arith.divf %94, %95 : vector<1x1xf32>
    %97 = arith.mulf %88, %88 : vector<1x1xf32>
    %98 = arith.subf %96, %97 : vector<1x1xf32>
    %cst_23 = arith.constant 9.99999974E-6 : f32
    %99 = vector.broadcast %cst_23 : f32 to vector<1x1xf32>
    %100 = arith.addf %98, %99 : vector<1x1xf32>
    %101 = math.rsqrt %100 : vector<1x1xf32>
    %102 = vector.broadcast %101 : vector<1x1xf32> to vector<8x1xf32>
    %103 = arith.mulf %102, %79 : vector<8x1xf32>
    %104 = vector.broadcast %88 : vector<1x1xf32> to vector<8x1xf32>
    %105 = arith.mulf %104, %103 : vector<8x1xf32>
    %106 = arith.subf %80, %105 : vector<8x1xf32>
    %107 = vector.broadcast %103 : vector<8x1xf32> to vector<8x256xf32>
    %108 = arith.mulf %81, %107 : vector<8x256xf32>
    %109 = vector.broadcast %106 : vector<8x1xf32> to vector<8x256xf32>
    %110 = arith.addf %108, %109 : vector<8x256xf32>
    %111 = vector.extract_strided_slice %78 {offsets = [0, 256], sizes = [8, 256], strides = [1, 1]} : vector<8x512xf32> to vector<8x256xf32>
    %112 = vector.shape_cast %111 : vector<8x256xf32> to vector<1x8x256xf32>
    %cst_24 = arith.constant dense<0.000000e+00> : vector<1xf32>
    %113 = vector.multi_reduction <add>, %112, %cst_24 [1, 2] : vector<1x8x256xf32> to vector<1xf32>
    %114 = vector.shape_cast %113 : vector<1xf32> to vector<1x1x1xf32>
    %115 = vector.extract %114[0, 0, 0] : f32 from vector<1x1x1xf32>
    %116 = vector.broadcast %115 : f32 to vector<1x1xf32>
    %cst_25 = arith.constant 2.048000e+03 : f32
    %117 = vector.broadcast %cst_25 : f32 to vector<1x1xf32>
    %118 = arith.divf %116, %117 : vector<1x1xf32>
    %119 = arith.mulf %111, %111 : vector<8x256xf32>
    %120 = vector.shape_cast %119 : vector<8x256xf32> to vector<1x8x256xf32>
    %cst_26 = arith.constant dense<0.000000e+00> : vector<1xf32>
    %121 = vector.multi_reduction <add>, %120, %cst_26 [1, 2] : vector<1x8x256xf32> to vector<1xf32>
    %122 = vector.shape_cast %121 : vector<1xf32> to vector<1x1x1xf32>
    %123 = vector.extract %122[0, 0, 0] : f32 from vector<1x1x1xf32>
    %124 = vector.broadcast %123 : f32 to vector<1x1xf32>
    %cst_27 = arith.constant 2.048000e+03 : f32
    %125 = vector.broadcast %cst_27 : f32 to vector<1x1xf32>
    %126 = arith.divf %124, %125 : vector<1x1xf32>
    %127 = arith.mulf %118, %118 : vector<1x1xf32>
    %128 = arith.subf %126, %127 : vector<1x1xf32>
    %cst_28 = arith.constant 9.99999974E-6 : f32
    %129 = vector.broadcast %cst_28 : f32 to vector<1x1xf32>
    %130 = arith.addf %128, %129 : vector<1x1xf32>
    %131 = math.rsqrt %130 : vector<1x1xf32>
    %132 = vector.broadcast %131 : vector<1x1xf32> to vector<8x1xf32>
    %133 = arith.mulf %132, %79 : vector<8x1xf32>
    %134 = vector.broadcast %118 : vector<1x1xf32> to vector<8x1xf32>
    %135 = arith.mulf %134, %133 : vector<8x1xf32>
    %136 = arith.subf %80, %135 : vector<8x1xf32>
    %137 = vector.broadcast %133 : vector<8x1xf32> to vector<8x256xf32>
    %138 = arith.mulf %111, %137 : vector<8x256xf32>
    %139 = vector.broadcast %136 : vector<8x1xf32> to vector<8x256xf32>
    %140 = arith.addf %138, %139 : vector<8x256xf32>
    %141 = tpu.concatenate %110, %140 in 1 : vector<8x256xf32>, vector<8x256xf32> -> vector<8x512xf32>
    %cst_29 = arith.constant 5.000000e-01 : f32
    %142 = vector.broadcast %cst_29 : f32 to vector<8x512xf32>
    %143 = arith.mulf %142, %141 : vector<8x512xf32>
    %144 = arith.mulf %141, %141 : vector<8x512xf32>
    %145 = arith.mulf %144, %141 : vector<8x512xf32>
    %cst_30 = arith.constant 4.471500e-02 : f32
    %146 = vector.broadcast %cst_30 : f32 to vector<8x512xf32>
    %147 = arith.mulf %146, %145 : vector<8x512xf32>
    %148 = arith.addf %141, %147 : vector<8x512xf32>
    %cst_31 = arith.constant 0.797884583 : f32
    %149 = vector.broadcast %cst_31 : f32 to vector<8x512xf32>
    %150 = arith.mulf %149, %148 : vector<8x512xf32>
    %151 = math.tanh %150 : vector<8x512xf32>
    %cst_32 = arith.constant 1.000000e+00 : f32
    %152 = vector.broadcast %cst_32 : f32 to vector<8x512xf32>
    %153 = arith.addf %152, %151 : vector<8x512xf32>
    %154 = arith.mulf %143, %153 : vector<8x512xf32>
    %c0_33 = arith.constant 0 : index
    %c0_34 = arith.constant 0 : index
    %155 = vector.load %arg5[%c0_33, %c0_34] : memref<8x72xf32, #tpu.memory_space<vmem>>, vector<8x72xf32>
    %c17_i32_35 = arith.constant 17 : i32
    %156 = tpu.dynamic_rotate %154 by %c17_i32_35 dim 1 : vector<8x512xf32>, i32 -> vector<8x512xf32>
    %157 = vector.broadcast %13 : vector<1x512xf32> to vector<8x512xf32>
    %158 = arith.mulf %156, %157 : vector<8x512xf32>
    %c16_i32_36 = arith.constant 16 : i32
    %159 = tpu.dynamic_rotate %154 by %c16_i32_36 dim 1 : vector<8x512xf32>, i32 -> vector<8x512xf32>
    %160 = vector.broadcast %17 : vector<1x512xf32> to vector<8x512xf32>
    %161 = arith.mulf %159, %160 : vector<8x512xf32>
    %c15_i32_37 = arith.constant 15 : i32
    %162 = tpu.dynamic_rotate %154 by %c15_i32_37 dim 1 : vector<8x512xf32>, i32 -> vector<8x512xf32>
    %163 = vector.broadcast %24 : vector<1x512xf32> to vector<8x512xf32>
    %164 = arith.mulf %162, %163 : vector<8x512xf32>
    %c1_i32_38 = arith.constant 1 : i32
    %165 = tpu.dynamic_rotate %154 by %c1_i32_38 dim 1 : vector<8x512xf32>, i32 -> vector<8x512xf32>
    %166 = vector.broadcast %28 : vector<1x512xf32> to vector<8x512xf32>
    %167 = arith.mulf %165, %166 : vector<8x512xf32>
    %c511_i32_39 = arith.constant 511 : i32
    %168 = tpu.dynamic_rotate %154 by %c511_i32_39 dim 1 : vector<8x512xf32>, i32 -> vector<8x512xf32>
    %169 = vector.broadcast %32 : vector<1x512xf32> to vector<8x512xf32>
    %170 = arith.mulf %168, %169 : vector<8x512xf32>
    %c497_i32_40 = arith.constant 497 : i32
    %171 = tpu.dynamic_rotate %154 by %c497_i32_40 dim 1 : vector<8x512xf32>, i32 -> vector<8x512xf32>
    %172 = vector.broadcast %39 : vector<1x512xf32> to vector<8x512xf32>
    %173 = arith.mulf %171, %172 : vector<8x512xf32>
    %c496_i32_41 = arith.constant 496 : i32
    %174 = tpu.dynamic_rotate %154 by %c496_i32_41 dim 1 : vector<8x512xf32>, i32 -> vector<8x512xf32>
    %175 = vector.broadcast %43 : vector<1x512xf32> to vector<8x512xf32>
    %176 = arith.mulf %174, %175 : vector<8x512xf32>
    %c495_i32_42 = arith.constant 495 : i32
    %177 = tpu.dynamic_rotate %154 by %c495_i32_42 dim 1 : vector<8x512xf32>, i32 -> vector<8x512xf32>
    %178 = vector.broadcast %50 : vector<1x512xf32> to vector<8x512xf32>
    %179 = arith.mulf %177, %178 : vector<8x512xf32>
    %180 = tpu.concatenate %158, %161, %164, %167, %154, %170, %173, %176, %179 in 0 : vector<8x512xf32>, vector<8x512xf32>, vector<8x512xf32>, vector<8x512xf32>, vector<8x512xf32>, vector<8x512xf32>, vector<8x512xf32>, vector<8x512xf32>, vector<8x512xf32> -> vector<72x512xf32>
    %cst_43 = arith.constant dense<0.000000e+00> : vector<8x512xf32>
    %181 = tpu.matmul %155, %180, %cst_43 {dimension_numbers = #tpu.dot_dimension_numbers<[1], [0], [0], [1], [0, 0, 1, 1], [], []>} : vector<8x72xf32>, vector<72x512xf32>, vector<8x512xf32> -> vector<8x512xf32>
    %c0_44 = arith.constant 0 : index
    %c0_45 = arith.constant 0 : index
    %182 = vector.load %arg6[%c0_44, %c0_45] : memref<8x1xf32, #tpu.memory_space<vmem>>, vector<8x1xf32>
    %c0_46 = arith.constant 0 : index
    %c0_47 = arith.constant 0 : index
    %183 = vector.load %arg7[%c0_46, %c0_47] : memref<8x1xf32, #tpu.memory_space<vmem>>, vector<8x1xf32>
    %184 = vector.extract_strided_slice %181 {offsets = [0, 0], sizes = [8, 256], strides = [1, 1]} : vector<8x512xf32> to vector<8x256xf32>
    %185 = vector.shape_cast %184 : vector<8x256xf32> to vector<1x8x256xf32>
    %cst_48 = arith.constant dense<0.000000e+00> : vector<1xf32>
    %186 = vector.multi_reduction <add>, %185, %cst_48 [1, 2] : vector<1x8x256xf32> to vector<1xf32>
    %187 = vector.shape_cast %186 : vector<1xf32> to vector<1x1x1xf32>
    %188 = vector.extract %187[0, 0, 0] : f32 from vector<1x1x1xf32>
    %189 = vector.broadcast %188 : f32 to vector<1x1xf32>
    %cst_49 = arith.constant 2.048000e+03 : f32
    %190 = vector.broadcast %cst_49 : f32 to vector<1x1xf32>
    %191 = arith.divf %189, %190 : vector<1x1xf32>
    %192 = arith.mulf %184, %184 : vector<8x256xf32>
    %193 = vector.shape_cast %192 : vector<8x256xf32> to vector<1x8x256xf32>
    %cst_50 = arith.constant dense<0.000000e+00> : vector<1xf32>
    %194 = vector.multi_reduction <add>, %193, %cst_50 [1, 2] : vector<1x8x256xf32> to vector<1xf32>
    %195 = vector.shape_cast %194 : vector<1xf32> to vector<1x1x1xf32>
    %196 = vector.extract %195[0, 0, 0] : f32 from vector<1x1x1xf32>
    %197 = vector.broadcast %196 : f32 to vector<1x1xf32>
    %cst_51 = arith.constant 2.048000e+03 : f32
    %198 = vector.broadcast %cst_51 : f32 to vector<1x1xf32>
    %199 = arith.divf %197, %198 : vector<1x1xf32>
    %200 = arith.mulf %191, %191 : vector<1x1xf32>
    %201 = arith.subf %199, %200 : vector<1x1xf32>
    %cst_52 = arith.constant 9.99999974E-6 : f32
    %202 = vector.broadcast %cst_52 : f32 to vector<1x1xf32>
    %203 = arith.addf %201, %202 : vector<1x1xf32>
    %204 = math.rsqrt %203 : vector<1x1xf32>
    %205 = vector.broadcast %204 : vector<1x1xf32> to vector<8x1xf32>
    %206 = arith.mulf %205, %182 : vector<8x1xf32>
    %207 = vector.broadcast %191 : vector<1x1xf32> to vector<8x1xf32>
    %208 = arith.mulf %207, %206 : vector<8x1xf32>
    %209 = arith.subf %183, %208 : vector<8x1xf32>
    %210 = vector.broadcast %206 : vector<8x1xf32> to vector<8x256xf32>
    %211 = arith.mulf %184, %210 : vector<8x256xf32>
    %212 = vector.broadcast %209 : vector<8x1xf32> to vector<8x256xf32>
    %213 = arith.addf %211, %212 : vector<8x256xf32>
    %214 = vector.extract_strided_slice %181 {offsets = [0, 256], sizes = [8, 256], strides = [1, 1]} : vector<8x512xf32> to vector<8x256xf32>
    %215 = vector.shape_cast %214 : vector<8x256xf32> to vector<1x8x256xf32>
    %cst_53 = arith.constant dense<0.000000e+00> : vector<1xf32>
    %216 = vector.multi_reduction <add>, %215, %cst_53 [1, 2] : vector<1x8x256xf32> to vector<1xf32>
    %217 = vector.shape_cast %216 : vector<1xf32> to vector<1x1x1xf32>
    %218 = vector.extract %217[0, 0, 0] : f32 from vector<1x1x1xf32>
    %219 = vector.broadcast %218 : f32 to vector<1x1xf32>
    %cst_54 = arith.constant 2.048000e+03 : f32
    %220 = vector.broadcast %cst_54 : f32 to vector<1x1xf32>
    %221 = arith.divf %219, %220 : vector<1x1xf32>
    %222 = arith.mulf %214, %214 : vector<8x256xf32>
    %223 = vector.shape_cast %222 : vector<8x256xf32> to vector<1x8x256xf32>
    %cst_55 = arith.constant dense<0.000000e+00> : vector<1xf32>
    %224 = vector.multi_reduction <add>, %223, %cst_55 [1, 2] : vector<1x8x256xf32> to vector<1xf32>
    %225 = vector.shape_cast %224 : vector<1xf32> to vector<1x1x1xf32>
    %226 = vector.extract %225[0, 0, 0] : f32 from vector<1x1x1xf32>
    %227 = vector.broadcast %226 : f32 to vector<1x1xf32>
    %cst_56 = arith.constant 2.048000e+03 : f32
    %228 = vector.broadcast %cst_56 : f32 to vector<1x1xf32>
    %229 = arith.divf %227, %228 : vector<1x1xf32>
    %230 = arith.mulf %221, %221 : vector<1x1xf32>
    %231 = arith.subf %229, %230 : vector<1x1xf32>
    %cst_57 = arith.constant 9.99999974E-6 : f32
    %232 = vector.broadcast %cst_57 : f32 to vector<1x1xf32>
    %233 = arith.addf %231, %232 : vector<1x1xf32>
    %234 = math.rsqrt %233 : vector<1x1xf32>
    %235 = vector.broadcast %234 : vector<1x1xf32> to vector<8x1xf32>
    %236 = arith.mulf %235, %182 : vector<8x1xf32>
    %237 = vector.broadcast %221 : vector<1x1xf32> to vector<8x1xf32>
    %238 = arith.mulf %237, %236 : vector<8x1xf32>
    %239 = arith.subf %183, %238 : vector<8x1xf32>
    %240 = vector.broadcast %236 : vector<8x1xf32> to vector<8x256xf32>
    %241 = arith.mulf %214, %240 : vector<8x256xf32>
    %242 = vector.broadcast %239 : vector<8x1xf32> to vector<8x256xf32>
    %243 = arith.addf %241, %242 : vector<8x256xf32>
    %244 = tpu.concatenate %213, %243 in 1 : vector<8x256xf32>, vector<8x256xf32> -> vector<8x512xf32>
    %c0_58 = arith.constant 0 : index
    %c0_59 = arith.constant 0 : index
    %245 = vector.load %arg8[%c0_58, %c0_59] : memref<8x512xf32, #tpu.memory_space<vmem>>, vector<8x512xf32>
    tpu.vector_store %arg8[%c0_58, %c0_59], %244 {strides = array<i32>} : memref<8x512xf32, #tpu.memory_space<vmem>>, vector<8x512xf32>,
    return
  }
  func.func @transform_0(%arg0: i32) -> (i32, i32) {
    %c0_i32 = arith.constant 0 : i32
    %c0_i32_0 = arith.constant 0 : i32
    %c0_i32_1 = arith.constant 0 : i32
    return %c0_i32, %c0_i32_0 : i32, i32
  }
  func.func @transform_1(%arg0: i32) -> (i32, i32) {
    %c0_i32 = arith.constant 0 : i32
    %c0_i32_0 = arith.constant 0 : i32
    %c0_i32_1 = arith.constant 0 : i32
    return %c0_i32, %c0_i32_0 : i32, i32
  }
  func.func @transform_2(%arg0: i32) -> (i32, i32) {
    %c0_i32 = arith.constant 0 : i32
    %c0_i32_0 = arith.constant 0 : i32
    %c0_i32_1 = arith.constant 0 : i32
    return %c0_i32, %c0_i32_0 : i32, i32
  }
  func.func @transform_3(%arg0: i32) -> (i32, i32) {
    %c0_i32 = arith.constant 0 : i32
    %c0_i32_0 = arith.constant 0 : i32
    %c0_i32_1 = arith.constant 0 : i32
    return %c0_i32, %c0_i32_0 : i32, i32
  }
  func.func @transform_4(%arg0: i32) -> (i32, i32) {
    %c0_i32 = arith.constant 0 : i32
    %c0_i32_0 = arith.constant 0 : i32
    %c0_i32_1 = arith.constant 0 : i32
    return %c0_i32, %c0_i32_0 : i32, i32
  }
  func.func @transform_5(%arg0: i32) -> (i32, i32) {
    %c0_i32 = arith.constant 0 : i32
    %c0_i32_0 = arith.constant 0 : i32
    %c0_i32_1 = arith.constant 0 : i32
    return %c0_i32, %c0_i32_0 : i32, i32
  }
  func.func @transform_6(%arg0: i32) -> (i32, i32) {
    %c0_i32 = arith.constant 0 : i32
    %c0_i32_0 = arith.constant 0 : i32
    %c0_i32_1 = arith.constant 0 : i32
    return %c0_i32, %c0_i32_0 : i32, i32
  }
  func.func @transform_7(%arg0: i32) -> (i32, i32) {
    %c0_i32 = arith.constant 0 : i32
    %c0_i32_0 = arith.constant 0 : i32
    %c0_i32_1 = arith.constant 0 : i32
    return %c0_i32, %c0_i32_0 : i32, i32
  }
}

</mosaic_0001>

<llo_original>
// kernel: tpu_custom_call.1
$region0: #{tpu_custom_call.1}
  #allocation0 [shape = 'u32[]', space=smem, size = 0x4, offset = 0x4, fixed_abs, tag = 'smem constant byte address 0x4 - core index']
  #allocation1 [shape = 'u32[144,128]{1,0:T(1,128)}', space=vmem, size = 0x12000, scoped, tag = 'internal scratch']
  %s0 = inlined_call_operand.vmem [shape: f32[4,512], index: 0, kind: input, shape index: {}]
  %s1 = inlined_call_operand.vmem [shape: f32[8,36], index: 1, kind: input, shape index: {}]
  %s2 = inlined_call_operand.vmem [shape: f32[8,1], index: 2, kind: input, shape index: {}]
  %s3 = inlined_call_operand.vmem [shape: f32[8,1], index: 3, kind: input, shape index: {}]
  %s4 = inlined_call_operand.vmem [shape: f32[8,72], index: 4, kind: input, shape index: {}]
  %s5 = inlined_call_operand.vmem [shape: f32[8,1], index: 5, kind: input, shape index: {}]
  %s6 = inlined_call_operand.vmem [shape: f32[8,1], index: 6, kind: input, shape index: {}]
  %s7 = inlined_call_operand.hbm [shape: f32[8,512], index: 7, kind: output, shape index: {}]
  %s8 = sld [smem:[#allocation0]]
  $region38: #{tpu_custom_call.1} parent=0
    _
  %s10 = ssub.s32 1, %s8
  %s11 = scalar_select 0, %s10, %s8
  $region1: #{tpu_custom_call.1} parent=0
    #allocation2 [shape = 'u8[16384]{0}', space=vmem, size = 0x4000, scoped, tag = 'output window, operand 0, single buffered']
    #allocation3 [shape = 's32[1]{0}', space=sflag, size = 0x4, scoped, tag = 'scoped memory for tpu_custom_call.1']
    %12 = vsyncpa [#allocation3], 0
    // Predicated region
    $region2: #{tpu_custom_call.1} parent=1 // pred_check
      _
    $region3: #{tpu_custom_call.1} parent=1 // pred_check_branch
      %14 = sbr.rel (0) target = $region5
    $region4: #{tpu_custom_call.1} parent=1 // pred_region
      _
    $region5: #{tpu_custom_call.1} parent=1 // pred_fallthru
      _
    // Predicated region
    $region6: #{tpu_custom_call.1} parent=1 // pred_check
      _
    $region7: #{tpu_custom_call.1} parent=1 // pred_check_branch
      %16 = sbr.rel (0) target = $region9
    $region8: #{tpu_custom_call.1} parent=1 // pred_region
      _
    $region9: #{tpu_custom_call.1} parent=1 // pred_fallthru
      _
    // Predicated region
    $region10: #{tpu_custom_call.1} parent=1 // pred_check
      _
    $region11: #{tpu_custom_call.1} parent=1 // pred_check_branch
      %18 = sbr.rel (0) target = $region13
    $region12: #{tpu_custom_call.1} parent=1 // pred_region
      _
    $region13: #{tpu_custom_call.1} parent=1 // pred_fallthru
      _
    // Predicated region
    $region14: #{tpu_custom_call.1} parent=1 // pred_check
      _
    $region15: #{tpu_custom_call.1} parent=1 // pred_check_branch
      %20 = sbr.rel (0) target = $region17
    $region16: #{tpu_custom_call.1} parent=1 // pred_region
      _
    $region17: #{tpu_custom_call.1} parent=1 // pred_fallthru
      _
    // Predicated region
    $region18: #{tpu_custom_call.1} parent=1 // pred_check
      _
    $region19: #{tpu_custom_call.1} parent=1 // pred_check_branch
      %22 = sbr.rel (0) target = $region21
    $region20: #{tpu_custom_call.1} parent=1 // pred_region
      _
    $region21: #{tpu_custom_call.1} parent=1 // pred_fallthru
      _
    // Predicated region
    $region22: #{tpu_custom_call.1} parent=1 // pred_check
      _
    $region23: #{tpu_custom_call.1} parent=1 // pred_check_branch
      %24 = sbr.rel (0) target = $region25
    $region24: #{tpu_custom_call.1} parent=1 // pred_region
      _
    $region25: #{tpu_custom_call.1} parent=1 // pred_fallthru
      _
    // Predicated region
    $region26: #{tpu_custom_call.1} parent=1 // pred_check
      _
    $region27: #{tpu_custom_call.1} parent=1 // pred_check_branch
      %26 = sbr.rel (0) target = $region29
    $region28: #{tpu_custom_call.1} parent=1 // pred_region
      _
    $region29: #{tpu_custom_call.1} parent=1 // pred_fallthru
      _
    %v27 = vlaneseq
    %v28 = vand.u32 %v27, 127
    %v29 = vadd.s32 %v28, 128
    %v30 = vadd.s32 %v28, 256
    %v31 = vadd.s32 %v28, 384
    %v32 = vand.u32 %v28, 255
    %v33 = vand.u32 %v29, 255
    %v34 = vand.u32 %v30, 255
    %v35 = vand.u32 %v31, 255
    %v36 = vand.u32 %v32, 15
    %v37 = vand.u32 %v33, 15
    %v38 = vand.u32 %v34, 15
    %v39 = vand.u32 %v35, 15
    %v40 = vshra.s32 %v32, 4
    %v41 = vshra.s32 %v33, 4
    %v42 = vshra.s32 %v34, 4
    %v43 = vshra.s32 %v35, 4
    %vm44 = vcmp.ge.s32.totalorder %v40, 1
    %vm45 = vcmp.ge.s32.totalorder %v41, 1
    %vm46 = vcmp.ge.s32.totalorder %v42, 1
    %vm47 = vcmp.ge.s32.totalorder %v43, 1
    %vm48 = vcmp.ge.s32.totalorder %v36, 1
    %vm49 = vcmp.ge.s32.totalorder %v37, 1
    %vm50 = vcmp.ge.s32.totalorder %v38, 1
    %vm51 = vcmp.ge.s32.totalorder %v39, 1
    %vm52 = vmand %vm44, %vm48
    %vm53 = vmand %vm45, %vm49
    %vm54 = vmand %vm46, %vm50
    %vm55 = vmand %vm47, %vm51
    %v56 = vsel %vm52, 1, 0
    %v57 = vsel %vm53, 1, 0
    %v58 = vsel %vm54, 1, 0
    %v59 = vsel %vm55, 1, 0
    %v60 = vcvt.s32.f32 %v56
    %v61 = vcvt.s32.f32 %v57
    %v62 = vcvt.s32.f32 %v58
    %v63 = vcvt.s32.f32 %v59
    %v64 = vsel %vm44, 1, 0
    %v65 = vsel %vm45, 1, 0
    %v66 = vsel %vm46, 1, 0
    %v67 = vsel %vm47, 1, 0
    %v68 = vcvt.s32.f32 %v64
    %v69 = vcvt.s32.f32 %v65
    %v70 = vcvt.s32.f32 %v66
    %v71 = vcvt.s32.f32 %v67
    %vm72 = vcmp.le.s32.totalorder %v36, 14
    %vm73 = vcmp.le.s32.totalorder %v37, 14
    %vm74 = vcmp.le.s32.totalorder %v38, 14
    %vm75 = vcmp.le.s32.totalorder %v39, 14
    %vm76 = vmand %vm44, %vm72
    %vm77 = vmand %vm45, %vm73
    %vm78 = vmand %vm46, %vm74
    %vm79 = vmand %vm47, %vm75
    %v80 = vsel %vm76, 1, 0
    %v81 = vsel %vm77, 1, 0
    %v82 = vsel %vm78, 1, 0
    %v83 = vsel %vm79, 1, 0
    %v84 = vcvt.s32.f32 %v80
    %v85 = vcvt.s32.f32 %v81
    %v86 = vcvt.s32.f32 %v82
    %v87 = vcvt.s32.f32 %v83
    %v88 = vsel %vm48, 1, 0
    %v89 = vsel %vm49, 1, 0
    %v90 = vsel %vm50, 1, 0
    %v91 = vsel %vm51, 1, 0
    %v92 = vcvt.s32.f32 %v88
    %v93 = vcvt.s32.f32 %v89
    %v94 = vcvt.s32.f32 %v90
    %v95 = vcvt.s32.f32 %v91
    %v96 = vsel %vm72, 1, 0
    %v97 = vsel %vm73, 1, 0
    %v98 = vsel %vm74, 1, 0
    %v99 = vsel %vm75, 1, 0
    %v100 = vcvt.s32.f32 %v96
    %v101 = vcvt.s32.f32 %v97
    %v102 = vcvt.s32.f32 %v98
    %v103 = vcvt.s32.f32 %v99
    %vm104 = vcmp.le.s32.totalorder %v40, 14
    %vm105 = vcmp.le.s32.totalorder %v41, 14
    %vm106 = vcmp.le.s32.totalorder %v42, 14
    %vm107 = vcmp.le.s32.totalorder %v43, 14
    %vm108 = vmand %vm104, %vm48
    %vm109 = vmand %vm105, %vm49
    %vm110 = vmand %vm106, %vm50
    %vm111 = vmand %vm107, %vm51
    %v112 = vsel %vm108, 1, 0
    %v113 = vsel %vm109, 1, 0
    %v114 = vsel %vm110, 1, 0
    %v115 = vsel %vm111, 1, 0
    %v116 = vcvt.s32.f32 %v112
    %v117 = vcvt.s32.f32 %v113
    %v118 = vcvt.s32.f32 %v114
    %v119 = vcvt.s32.f32 %v115
    %v120 = vsel %vm104, 1, 0
    %v121 = vsel %vm105, 1, 0
    %v122 = vsel %vm106, 1, 0
    %v123 = vsel %vm107, 1, 0
    %v124 = vcvt.s32.f32 %v120
    %v125 = vcvt.s32.f32 %v121
    %v126 = vcvt.s32.f32 %v122
    %v127 = vcvt.s32.f32 %v123
    %vm128 = vmand %vm104, %vm72
    %vm129 = vmand %vm105, %vm73
    %vm130 = vmand %vm106, %vm74
    %vm131 = vmand %vm107, %vm75
    %v132 = vsel %vm128, 1, 0
    %v133 = vsel %vm129, 1, 0
    %v134 = vsel %vm130, 1, 0
    %v135 = vsel %vm131, 1, 0
    %v136 = vcvt.s32.f32 %v132
    %v137 = vcvt.s32.f32 %v133
    %v138 = vcvt.s32.f32 %v134
    %v139 = vcvt.s32.f32 %v135
    %v140 = vld [vmem:[%s0] sm:$0xff]
    %v141 = vld [vmem:[%s0 + $0x8] sm:$0xff]
    %v142 = vld [vmem:[%s1] sm:$0xff]
    %v145 = vcombine.high %v140, %v140
    %v146 = vcombine.high %v141, %v141
    %149 = vrot.lane.b32.xlu0 %v140, 17
    %v150 = vpop.permute.xlu0 %149
    %151 = vrot.lane.b32.xlu0 %v145, 17
    %v152 = vpop.permute.xlu0 %151
    %153 = vrot.lane.b32.xlu0 %v141, 17
    %v154 = vpop.permute.xlu0 %153
    %155 = vrot.lane.b32.xlu0 %v146, 17
    %v156 = vpop.permute.xlu0 %155
    %vm157 = vcmp.lt.s32.totalorder %v28, 17
    %v158 = vsel %vm157, %v154, %v156
    %v159 = vsel %vm157, %v152, %v154
    %v160 = vsel %vm157, %v150, %v152
    %v161 = vsel %vm157, %v156, %v150
    %v162 = vmul.f32 %v161, %v60
    %v163 = vmul.f32 %v160, %v61
    %v164 = vmul.f32 %v159, %v62
    %v165 = vmul.f32 %v158, %v63
    %166 = vrot.lane.b32.xlu0 %v140, 16
    %v167 = vpop.permute.xlu0 %166
    %168 = vrot.lane.b32.xlu0 %v145, 16
    %v169 = vpop.permute.xlu0 %168
    %170 = vrot.lane.b32.xlu0 %v141, 16
    %v171 = vpop.permute.xlu0 %170
    %172 = vrot.lane.b32.xlu0 %v146, 16
    %v173 = vpop.permute.xlu0 %172
    %vm174 = vcmp.lt.s32.totalorder %v28, 16
    %v175 = vsel %vm174, %v171, %v173
    %v176 = vsel %vm174, %v169, %v171
    %v177 = vsel %vm174, %v167, %v169
    %v178 = vsel %vm174, %v173, %v167
    %v179 = vmul.f32 %v178, %v68
    %v180 = vmul.f32 %v177, %v69
    %v181 = vmul.f32 %v176, %v70
    %v182 = vmul.f32 %v175, %v71
    %183 = vrot.lane.b32.xlu0 %v140, 15
    %v184 = vpop.permute.xlu0 %183
    %185 = vrot.lane.b32.xlu0 %v145, 15
    %v186 = vpop.permute.xlu0 %185
    %187 = vrot.lane.b32.xlu0 %v141, 15
    %v188 = vpop.permute.xlu0 %187
    %189 = vrot.lane.b32.xlu0 %v146, 15
    %v190 = vpop.permute.xlu0 %189
    %vm191 = vcmp.lt.s32.totalorder %v28, 15
    %v192 = vsel %vm191, %v188, %v190
    %v193 = vsel %vm191, %v186, %v188
    %v194 = vsel %vm191, %v184, %v186
    %v195 = vsel %vm191, %v190, %v184
    %v196 = vmul.f32 %v195, %v84
    %v197 = vmul.f32 %v194, %v85
    %v198 = vmul.f32 %v193, %v86
    %v199 = vmul.f32 %v192, %v87
    %200 = vrot.lane.b32.xlu0 %v140, 1
    %v201 = vpop.permute.xlu0 %200
    %202 = vrot.lane.b32.xlu0 %v145, 1
    %v203 = vpop.permute.xlu0 %202
    %204 = vrot.lane.b32.xlu0 %v141, 1
    %v205 = vpop.permute.xlu0 %204
    %206 = vrot.lane.b32.xlu0 %v146, 1
    %v207 = vpop.permute.xlu0 %206
    %vm208 = vcmp.lt.s32.totalorder %v28, 1
    %v209 = vsel %vm208, %v205, %v207
    %v210 = vsel %vm208, %v203, %v205
    %v211 = vsel %vm208, %v201, %v203
    %v212 = vsel %vm208, %v207, %v201
    %v213 = vmul.f32 %v212, %v92
    %v214 = vmul.f32 %v211, %v93
    %v215 = vmul.f32 %v210, %v94
    %v216 = vmul.f32 %v209, %v95
    %217 = vrot.lane.b32.xlu0 %v140, 127
    %v218 = vpop.permute.xlu0 %217
    %219 = vrot.lane.b32.xlu0 %v145, 127
    %v220 = vpop.permute.xlu0 %219
    %221 = vrot.lane.b32.xlu0 %v141, 127
    %v222 = vpop.permute.xlu0 %221
    %223 = vrot.lane.b32.xlu0 %v146, 127
    %v224 = vpop.permute.xlu0 %223
    %vm225 = vcmp.lt.s32.totalorder %v28, 127
    %v226 = vsel %vm225, %v222, %v224
    %v227 = vsel %vm225, %v220, %v222
    %v228 = vsel %vm225, %v218, %v220
    %v229 = vsel %vm225, %v224, %v218
    %v230 = vmul.f32 %v228, %v100
    %v231 = vmul.f32 %v227, %v101
    %v232 = vmul.f32 %v226, %v102
    %v233 = vmul.f32 %v229, %v103
    %234 = vrot.lane.b32.xlu0 %v140, 113
    %v235 = vpop.permute.xlu0 %234
    %236 = vrot.lane.b32.xlu0 %v145, 113
    %v237 = vpop.permute.xlu0 %236
    %238 = vrot.lane.b32.xlu0 %v141, 113
    %v239 = vpop.permute.xlu0 %238
    %240 = vrot.lane.b32.xlu0 %v146, 113
    %v241 = vpop.permute.xlu0 %240
    %vm242 = vcmp.lt.s32.totalorder %v28, 113
    %v243 = vsel %vm242, %v239, %v241
    %v244 = vsel %vm242, %v237, %v239
    %v245 = vsel %vm242, %v235, %v237
    %v246 = vsel %vm242, %v241, %v235
    %v247 = vmul.f32 %v245, %v116
    %v248 = vmul.f32 %v244, %v117
    %v249 = vmul.f32 %v243, %v118
    %v250 = vmul.f32 %v246, %v119
    %251 = vrot.lane.b32.xlu0 %v140, 112
    %v252 = vpop.permute.xlu0 %251
    %253 = vrot.lane.b32.xlu0 %v145, 112
    %v254 = vpop.permute.xlu0 %253
    %255 = vrot.lane.b32.xlu0 %v141, 112
    %v256 = vpop.permute.xlu0 %255
    %257 = vrot.lane.b32.xlu0 %v146, 112
    %v258 = vpop.permute.xlu0 %257
    %vm259 = vcmp.lt.s32.totalorder %v28, 112
    %v260 = vsel %vm259, %v256, %v258
    %v261 = vsel %vm259, %v254, %v256
    %v262 = vsel %vm259, %v252, %v254
    %v263 = vsel %vm259, %v258, %v252
    %v264 = vmul.f32 %v262, %v124
    %v265 = vmul.f32 %v261, %v125
    %v266 = vmul.f32 %v260, %v126
    %v267 = vmul.f32 %v263, %v127
    %268 = vrot.lane.b32.xlu0 %v140, 111
    %v269 = vpop.permute.xlu0 %268
    %270 = vrot.lane.b32.xlu0 %v145, 111
    %v271 = vpop.permute.xlu0 %270
    %272 = vrot.lane.b32.xlu0 %v141, 111
    %v273 = vpop.permute.xlu0 %272
    %274 = vrot.lane.b32.xlu0 %v146, 111
    %v275 = vpop.permute.xlu0 %274
    %vm276 = vcmp.lt.s32.totalorder %v28, 111
    %v277 = vsel %vm276, %v273, %v275
    %v278 = vsel %vm276, %v271, %v273
    %v279 = vsel %vm276, %v269, %v271
    %v280 = vsel %vm276, %v275, %v269
    %v281 = vmul.f32 %v279, %v136
    %v282 = vmul.f32 %v278, %v137
    %v283 = vmul.f32 %v277, %v138
    %v284 = vmul.f32 %v280, %v139
    %v289 = vrot.slane %v179, 4
    %v290 = vrot.slane %v180, 4
    %v291 = vrot.slane %v181, 4
    %v292 = vrot.slane %v182, 4
    %v301 = vrot.slane %v213, 4
    %v302 = vrot.slane %v214, 4
    %v303 = vrot.slane %v215, 4
    %v304 = vrot.slane %v216, 4
    %v313 = vrot.slane %v230, 4
    %v314 = vrot.slane %v231, 4
    %v315 = vrot.slane %v232, 4
    %v316 = vrot.slane %v233, 4
    %v325 = vrot.slane %v264, 4
    %v326 = vrot.slane %v265, 4
    %v327 = vrot.slane %v266, 4
    %v328 = vrot.slane %v267, 4
    %vm333 = vcmask 1043456
    %v334 = vsel %vm333, %v162, %v289
    %v335 = vsel %vm333, %v163, %v290
    %v336 = vsel %vm333, %v164, %v291
    %v337 = vsel %vm333, %v165, %v292
    %v338 = vsel %vm333, %v196, %v301
    %v339 = vsel %vm333, %v197, %v302
    %v340 = vsel %vm333, %v198, %v303
    %v341 = vsel %vm333, %v199, %v304
    %v342 = vsel %vm333, %v140, %v313
    %v343 = vsel %vm333, %v145, %v314
    %v344 = vsel %vm333, %v141, %v315
    %v345 = vsel %vm333, %v146, %v316
    %v346 = vsel %vm333, %v247, %v325
    %v347 = vsel %vm333, %v248, %v326
    %v348 = vsel %vm333, %v249, %v327
    %v349 = vsel %vm333, %v250, %v328
    %vm350 = vcmask 293888
    %v352 = vsel %vm350, %v142, 0
    %v355 = vsel %vm333, %v281, 0
    %v358 = vsel %vm333, %v282, 0
    %v361 = vsel %vm333, %v283, 0
    %v364 = vsel %vm333, %v284, 0
    %366 = vmatprep.subr.mxu0 0.0
    %367 = vmatpush1.msra.mxu0 0.0
    %368 = vmatprep.subr.mxu0 0.0
    %369 = vmatpush1.msra.mxu0 0.0
    %370 = vmatprep.subr.mxu0 0.0
    %371 = vmatpush1.msra.mxu0 0.0
    %372 = vmatprep.subr.mxu0 0.0
    %373 = vmatpush1.msra.mxu0 0.0
    %374 = vmatprep.subr.mxu0 0.0
    %375 = vmatpush1.msra.mxu0 0.0
    %376 = vmatprep.subr.mxu0 0.0
    %377 = vmatpush1.msra.mxu0 0.0
    %378 = vmatprep.subr.mxu0 0.0
    %379 = vmatpush1.msra.mxu0 0.0
    %380 = vmatprep.subr.mxu0 0.0
    %381 = vmatpush1.msra.mxu0 0.0
    %382 = vmatprep.subr.mxu0 0.0
    %383 = vmatpush1.msra.mxu0 0.0
    %384 = vmatprep.subr.mxu0 0.0
    %385 = vmatpush1.msra.mxu0 0.0
    %386 = vmatprep.subr.mxu0 0.0
    %387 = vmatpush1.msra.mxu0 0.0
    %388 = vmatprep.subr.mxu0 %v358
    %389 = vmatpush1.msra.mxu0 %v355
    %390 = vmatprep.subr.mxu0 %v347
    %391 = vmatpush1.msra.mxu0 %v346
    %392 = vmatprep.subr.mxu0 %v343
    %393 = vmatpush1.msra.mxu0 %v342
    %394 = vmatprep.subr.mxu0 %v339
    %395 = vmatpush1.msra.mxu0 %v338
    %396 = vmatprep.subr.mxu0 %v335
    %397 = vmatpush1.msra.mxu0 %v334
    %398 = vmatprep.subr.mxu0 0.0
    %399 = vmatpush2.msra.mxu0 0.0
    %400 = vmatprep.subr.mxu0 0.0
    %401 = vmatpush2.msra.mxu0 0.0
    %402 = vmatprep.subr.mxu0 0.0
    %403 = vmatpush2.msra.mxu0 0.0
    %404 = vmatprep.subr.mxu0 0.0
    %405 = vmatpush2.msra.mxu0 0.0
    %406 = vmatprep.subr.mxu0 0.0
    %407 = vmatpush2.msra.mxu0 0.0
    %408 = vmatprep.subr.mxu0 0.0
    %409 = vmatpush2.msra.mxu0 0.0
    %410 = vmatprep.subr.mxu0 0.0
    %411 = vmatpush2.msra.mxu0 0.0
    %412 = vmatprep.subr.mxu0 0.0
    %413 = vmatpush2.msra.mxu0 0.0
    %414 = vmatprep.subr.mxu0 0.0
    %415 = vmatpush2.msra.mxu0 0.0
    %416 = vmatprep.subr.mxu0 0.0
    %417 = vmatpush2.msra.mxu0 0.0
    %418 = vmatprep.subr.mxu0 0.0
    %419 = vmatpush2.msra.mxu0 0.0
    %420 = vmatprep.subr.mxu0 0.0
    %421 = vmatpush2.msra.mxu0 0.0
    %422 = vmatprep.subr.mxu0 0.0
    %423 = vmatpush2.msra.mxu0 0.0
    %424 = vmatprep.subr.mxu0 0.0
    %425 = vmatpush2.msra.mxu0 0.0
    %426 = vmatprep.subr.mxu0 0.0
    %427 = vmatpush2.msra.mxu0 0.0
    %428 = vmatprep.subr.mxu0 0.0
    %429 = vmatpush2.msra.mxu0 0.0
    %430 = vmatprep.mubr.f32.mxu0 0.0
    %431 = vmatmul.mubr.f32.gmra.mxu0 %v352
    %v432 = vpop.f32.mrf.mxu0
    %v433 = vadd.f32 0.0, %v432
    %v434 = vpop.f32.mrf.mxu0
    %v435 = vadd.f32 0.0, %v434
    %436 = vdwg.mxu0
    %437 = vmatprep.subr.mxu0 0.0
    %438 = vmatpush1.msra.mxu0 0.0
    %439 = vmatprep.subr.mxu0 0.0
    %440 = vmatpush1.msra.mxu0 0.0
    %441 = vmatprep.subr.mxu0 0.0
    %442 = vmatpush1.msra.mxu0 0.0
    %443 = vmatprep.subr.mxu0 0.0
    %444 = vmatpush1.msra.mxu0 0.0
    %445 = vmatprep.subr.mxu0 0.0
    %446 = vmatpush1.msra.mxu0 0.0
    %447 = vmatprep.subr.mxu0 0.0
    %448 = vmatpush1.msra.mxu0 0.0
    %449 = vmatprep.subr.mxu0 0.0
    %450 = vmatpush1.msra.mxu0 0.0
    %451 = vmatprep.subr.mxu0 0.0
    %452 = vmatpush1.msra.mxu0 0.0
    %453 = vmatprep.subr.mxu0 0.0
    %454 = vmatpush1.msra.mxu0 0.0
    %455 = vmatprep.subr.mxu0 0.0
    %456 = vmatpush1.msra.mxu0 0.0
    %457 = vmatprep.subr.mxu0 0.0
    %458 = vmatpush1.msra.mxu0 0.0
    %459 = vmatprep.subr.mxu0 %v364
    %460 = vmatpush1.msra.mxu0 %v361
    %461 = vmatprep.subr.mxu0 %v349
    %462 = vmatpush1.msra.mxu0 %v348
    %463 = vmatprep.subr.mxu0 %v345
    %464 = vmatpush1.msra.mxu0 %v344
    %465 = vmatprep.subr.mxu0 %v341
    %466 = vmatpush1.msra.mxu0 %v340
    %467 = vmatprep.subr.mxu0 %v337
    %468 = vmatpush1.msra.mxu0 %v336
    %469 = vmatprep.subr.mxu0 0.0
    %470 = vmatpush2.msra.mxu0 0.0
    %471 = vmatprep.subr.mxu0 0.0
    %472 = vmatpush2.msra.mxu0 0.0
    %473 = vmatprep.subr.mxu0 0.0
    %474 = vmatpush2.msra.mxu0 0.0
    %475 = vmatprep.subr.mxu0 0.0
    %476 = vmatpush2.msra.mxu0 0.0
    %477 = vmatprep.subr.mxu0 0.0
    %478 = vmatpush2.msra.mxu0 0.0
    %479 = vmatprep.subr.mxu0 0.0
    %480 = vmatpush2.msra.mxu0 0.0
    %481 = vmatprep.subr.mxu0 0.0
    %482 = vmatpush2.msra.mxu0 0.0
    %483 = vmatprep.subr.mxu0 0.0
    %484 = vmatpush2.msra.mxu0 0.0
    %485 = vmatprep.subr.mxu0 0.0
    %486 = vmatpush2.msra.mxu0 0.0
    %487 = vmatprep.subr.mxu0 0.0
    %488 = vmatpush2.msra.mxu0 0.0
    %489 = vmatprep.subr.mxu0 0.0
    %490 = vmatpush2.msra.mxu0 0.0
    %491 = vmatprep.subr.mxu0 0.0
    %492 = vmatpush2.msra.mxu0 0.0
    %493 = vmatprep.subr.mxu0 0.0
    %494 = vmatpush2.msra.mxu0 0.0
    %495 = vmatprep.subr.mxu0 0.0
    %496 = vmatpush2.msra.mxu0 0.0
    %497 = vmatprep.subr.mxu0 0.0
    %498 = vmatpush2.msra.mxu0 0.0
    %499 = vmatprep.subr.mxu0 0.0
    %500 = vmatpush2.msra.mxu0 0.0
    %501 = vmatprep.mubr.f32.mxu0 0.0
    %502 = vmatmul.mubr.f32.gmra.mxu0 %v352
    %v503 = vpop.f32.mrf.mxu0
    %v504 = vadd.f32 0.0, %v503
    %v505 = vpop.f32.mrf.mxu0
    %v506 = vadd.f32 0.0, %v505
    %507 = vdwg.mxu0
    %v508 = vld [vmem:[%s2] sm:$0xff]
    %v509 = vld [vmem:[%s3] sm:$0xff]
    %v510 = vadd.f32 %v433, %v435
    %511 = vadd.xlane.f32.xlu0 %v510
    %v512 = vpop.xlane.xlu0 %511
    %v513 = vrot.slane %v512, 4
    %v514 = vadd.f32 %v512, %v513
    %v515 = vrot.slane %v514, 2
    %v516 = vadd.f32 %v514, %v515
    %v517 = vrot.slane %v516, 1
    %v518 = vadd.f32 %v516, %v517
    %s519 = vtos %v518
    %v520 = vstv %s519
    %v521 = vrcp.pop 2048.0
    %v522 = vmul.f32 %v520, %v521
    %v523 = vmul.f32 %v433, %v433
    %v524 = vmul.f32 %v435, %v435
    %v525 = vadd.f32 %v523, %v524
    %526 = vadd.xlane.f32.xlu0 %v525
    %v527 = vpop.xlane.xlu0 %526
    %v528 = vrot.slane %v527, 4
    %v529 = vadd.f32 %v527, %v528
    %v530 = vrot.slane %v529, 2
    %v531 = vadd.f32 %v529, %v530
    %v532 = vrot.slane %v531, 1
    %v533 = vadd.f32 %v531, %v532
    %s534 = vtos %v533
    %v535 = vstv %s534
    %v536 = vmul.f32 %v535, %v521
    %v537 = vmul.f32 %v522, %v522
    %v538 = vsub.f32 %v536, %v537
    %v539 = vadd.f32 %v538, 1e-05
    %v540 = vrsqrt.pop %v539
    %v541 = vmul.f32 %v540, %v508
    %v542 = vmul.f32 %v522, %v541
    %v543 = vsub.f32 %v509, %v542
    %545 = vset.pattern.permute.xlu0 0
    %546 = vperm.xlu0 %545, %v541
    %v547 = vpop.permute.xlu0 %546
    %v549 = vmul.f32 %v433, %v547
    %v550 = vmul.f32 %v435, %v547
    %552 = vset.pattern.permute.xlu0 0
    %553 = vperm.xlu0 %552, %v543
    %v554 = vpop.permute.xlu0 %553
    %v556 = vadd.f32 %v549, %v554
    %v557 = vadd.f32 %v550, %v554
    %v558 = vadd.f32 %v504, %v506
    %559 = vadd.xlane.f32.xlu0 %v558
    %v560 = vpop.xlane.xlu0 %559
    %v561 = vrot.slane %v560, 4
    %v562 = vadd.f32 %v560, %v561
    %v563 = vrot.slane %v562, 2
    %v564 = vadd.f32 %v562, %v563
    %v565 = vrot.slane %v564, 1
    %v566 = vadd.f32 %v564, %v565
    %s567 = vtos %v566
    %v568 = vstv %s567
    %v569 = vmul.f32 %v568, %v521
    %v570 = vmul.f32 %v504, %v504
    %v571 = vmul.f32 %v506, %v506
    %v572 = vadd.f32 %v570, %v571
    %573 = vadd.xlane.f32.xlu0 %v572
    %v574 = vpop.xlane.xlu0 %573
    %v575 = vrot.slane %v574, 4
    %v576 = vadd.f32 %v574, %v575
    %v577 = vrot.slane %v576, 2
    %v578 = vadd.f32 %v576, %v577
    %v579 = vrot.slane %v578, 1
    %v580 = vadd.f32 %v578, %v579
    %s581 = vtos %v580
    %v582 = vstv %s581
    %v583 = vmul.f32 %v582, %v521
    %v584 = vmul.f32 %v569, %v569
    %v585 = vsub.f32 %v583, %v584
    %v586 = vadd.f32 %v585, 1e-05
    %v587 = vrsqrt.pop %v586
    %v588 = vmul.f32 %v587, %v508
    %v589 = vmul.f32 %v569, %v588
    %v590 = vsub.f32 %v509, %v589
    %592 = vset.pattern.permute.xlu0 0
    %593 = vperm.xlu0 %592, %v588
    %v594 = vpop.permute.xlu0 %593
    %v596 = vmul.f32 %v504, %v594
    %v597 = vmul.f32 %v506, %v594
    %599 = vset.pattern.permute.xlu0 0
    %600 = vperm.xlu0 %599, %v590
    %v601 = vpop.permute.xlu0 %600
    %v603 = vadd.f32 %v596, %v601
    %v604 = vadd.f32 %v597, %v601
    %v605 = vmul.f32 %v556, 0.5
    %v606 = vmul.f32 %v557, 0.5
    %v607 = vmul.f32 %v603, 0.5
    %v608 = vmul.f32 %v604, 0.5
    %v609 = vmul.f32 %v556, %v556
    %v610 = vmul.f32 %v557, %v557
    %v611 = vmul.f32 %v603, %v603
    %v612 = vmul.f32 %v604, %v604
    %v613 = vmul.f32 %v609, %v556
    %v614 = vmul.f32 %v610, %v557
    %v615 = vmul.f32 %v611, %v603
    %v616 = vmul.f32 %v612, %v604
    %v617 = vmul.f32 %v613, 0.044715
    %v618 = vmul.f32 %v614, 0.044715
    %v619 = vmul.f32 %v615, 0.044715
    %v620 = vmul.f32 %v616, 0.044715
    %v621 = vadd.f32 %v556, %v617
    %v622 = vadd.f32 %v557, %v618
    %v623 = vadd.f32 %v603, %v619
    %v624 = vadd.f32 %v604, %v620
    %v625 = vmul.f32 %v621, 0.7978846
    %v626 = vmul.f32 %v622, 0.7978846
    %v627 = vmul.f32 %v623, 0.7978846
    %v628 = vmul.f32 %v624, 0.7978846
    %v629 = vtanh.pop %v625
    %v630 = vtanh.pop %v626
    %v631 = vtanh.pop %v627
    %v632 = vtanh.pop %v628
    %v633 = vadd.f32 %v629, 1.0
    %v634 = vadd.f32 %v630, 1.0
    %v635 = vadd.f32 %v631, 1.0
    %v636 = vadd.f32 %v632, 1.0
    %v637 = vmul.f32 %v605, %v633
    %v638 = vmul.f32 %v606, %v634
    %v639 = vmul.f32 %v607, %v635
    %v640 = vmul.f32 %v608, %v636
    %v641 = vld [vmem:[%s4] sm:$0xff]
    %642 = vrot.lane.b32.xlu0 %v637, 17
    %v643 = vpop.permute.xlu0 %642
    %644 = vrot.lane.b32.xlu0 %v638, 17
    %v645 = vpop.permute.xlu0 %644
    %646 = vrot.lane.b32.xlu0 %v639, 17
    %v647 = vpop.permute.xlu0 %646
    %648 = vrot.lane.b32.xlu0 %v640, 17
    %v649 = vpop.permute.xlu0 %648
    %v650 = vsel %vm157, %v647, %v649
    %v651 = vsel %vm157, %v645, %v647
    %v652 = vsel %vm157, %v643, %v645
    %v653 = vsel %vm157, %v649, %v643
    %v654 = vmul.f32 %v653, %v60
    %v655 = vmul.f32 %v652, %v61
    %v656 = vmul.f32 %v651, %v62
    %v657 = vmul.f32 %v650, %v63
    %658 = vrot.lane.b32.xlu0 %v637, 16
    %v659 = vpop.permute.xlu0 %658
    %660 = vrot.lane.b32.xlu0 %v638, 16
    %v661 = vpop.permute.xlu0 %660
    %662 = vrot.lane.b32.xlu0 %v639, 16
    %v663 = vpop.permute.xlu0 %662
    %664 = vrot.lane.b32.xlu0 %v640, 16
    %v665 = vpop.permute.xlu0 %664
    %v666 = vsel %vm174, %v663, %v665
    %v667 = vsel %vm174, %v661, %v663
    %v668 = vsel %vm174, %v659, %v661
    %v669 = vsel %vm174, %v665, %v659
    %v670 = vmul.f32 %v669, %v68
    %v671 = vmul.f32 %v668, %v69
    %v672 = vmul.f32 %v667, %v70
    %v673 = vmul.f32 %v666, %v71
    %674 = vrot.lane.b32.xlu0 %v637, 15
    %v675 = vpop.permute.xlu0 %674
    %676 = vrot.lane.b32.xlu0 %v638, 15
    %v677 = vpop.permute.xlu0 %676
    %678 = vrot.lane.b32.xlu0 %v639, 15
    %v679 = vpop.permute.xlu0 %678
    %680 = vrot.lane.b32.xlu0 %v640, 15
    %v681 = vpop.permute.xlu0 %680
    %v682 = vsel %vm191, %v679, %v681
    %v683 = vsel %vm191, %v677, %v679
    %v684 = vsel %vm191, %v675, %v677
    %v685 = vsel %vm191, %v681, %v675
    %v686 = vmul.f32 %v685, %v84
    %v687 = vmul.f32 %v684, %v85
    %v688 = vmul.f32 %v683, %v86
    %v689 = vmul.f32 %v682, %v87
    %690 = vrot.lane.b32.xlu0 %v637, 1
    %v691 = vpop.permute.xlu0 %690
    %692 = vrot.lane.b32.xlu0 %v638, 1
    %v693 = vpop.permute.xlu0 %692
    %694 = vrot.lane.b32.xlu0 %v639, 1
    %v695 = vpop.permute.xlu0 %694
    %696 = vrot.lane.b32.xlu0 %v640, 1
    %v697 = vpop.permute.xlu0 %696
    %v698 = vsel %vm208, %v695, %v697
    %v699 = vsel %vm208, %v693, %v695
    %v700 = vsel %vm208, %v691, %v693
    %v701 = vsel %vm208, %v697, %v691
    %v702 = vmul.f32 %v701, %v92
    %v703 = vmul.f32 %v700, %v93
    %v704 = vmul.f32 %v699, %v94
    %v705 = vmul.f32 %v698, %v95
    %706 = vrot.lane.b32.xlu0 %v637, 127
    %v707 = vpop.permute.xlu0 %706
    %708 = vrot.lane.b32.xlu0 %v638, 127
    %v709 = vpop.permute.xlu0 %708
    %710 = vrot.lane.b32.xlu0 %v639, 127
    %v711 = vpop.permute.xlu0 %710
    %712 = vrot.lane.b32.xlu0 %v640, 127
    %v713 = vpop.permute.xlu0 %712
    %v714 = vsel %vm225, %v711, %v713
    %v715 = vsel %vm225, %v709, %v711
    %v716 = vsel %vm225, %v707, %v709
    %v717 = vsel %vm225, %v713, %v707
    %v718 = vmul.f32 %v716, %v100
    %v719 = vmul.f32 %v715, %v101
    %v720 = vmul.f32 %v714, %v102
    %v721 = vmul.f32 %v717, %v103
    %722 = vrot.lane.b32.xlu0 %v637, 113
    %v723 = vpop.permute.xlu0 %722
    %724 = vrot.lane.b32.xlu0 %v638, 113
    %v725 = vpop.permute.xlu0 %724
    %726 = vrot.lane.b32.xlu0 %v639, 113
    %v727 = vpop.permute.xlu0 %726
    %728 = vrot.lane.b32.xlu0 %v640, 113
    %v729 = vpop.permute.xlu0 %728
    %v730 = vsel %vm242, %v727, %v729
    %v731 = vsel %vm242, %v725, %v727
    %v732 = vsel %vm242, %v723, %v725
    %v733 = vsel %vm242, %v729, %v723
    %v734 = vmul.f32 %v732, %v116
    %v735 = vmul.f32 %v731, %v117
    %v736 = vmul.f32 %v730, %v118
    %v737 = vmul.f32 %v733, %v119
    %738 = vrot.lane.b32.xlu0 %v637, 112
    %v739 = vpop.permute.xlu0 %738
    %740 = vrot.lane.b32.xlu0 %v638, 112
    %v741 = vpop.permute.xlu0 %740
    %742 = vrot.lane.b32.xlu0 %v639, 112
    %v743 = vpop.permute.xlu0 %742
    %744 = vrot.lane.b32.xlu0 %v640, 112
    %v745 = vpop.permute.xlu0 %744
    %v746 = vsel %vm259, %v743, %v745
    %v747 = vsel %vm259, %v741, %v743
    %v748 = vsel %vm259, %v739, %v741
    %v749 = vsel %vm259, %v745, %v739
    %v750 = vmul.f32 %v748, %v124
    %v751 = vmul.f32 %v747, %v125
    %v752 = vmul.f32 %v746, %v126
    %v753 = vmul.f32 %v749, %v127
    %754 = vrot.lane.b32.xlu0 %v637, 111
    %v755 = vpop.permute.xlu0 %754
    %756 = vrot.lane.b32.xlu0 %v638, 111
    %v757 = vpop.permute.xlu0 %756
    %758 = vrot.lane.b32.xlu0 %v639, 111
    %v759 = vpop.permute.xlu0 %758
    %760 = vrot.lane.b32.xlu0 %v640, 111
    %v761 = vpop.permute.xlu0 %760
    %v762 = vsel %vm276, %v759, %v761
    %v763 = vsel %vm276, %v757, %v759
    %v764 = vsel %vm276, %v755, %v757
    %v765 = vsel %vm276, %v761, %v755
    %v766 = vmul.f32 %v764, %v136
    %v767 = vmul.f32 %v763, %v137
    %v768 = vmul.f32 %v762, %v138
    %v769 = vmul.f32 %v765, %v139
    %vm770 = vcmask 588800
    %v772 = vsel %vm770, %v641, 0
    %774 = vmatprep.subr.mxu0 0.0
    %775 = vmatpush1.msra.mxu0 0.0
    %776 = vmatprep.subr.mxu0 0.0
    %777 = vmatpush1.msra.mxu0 0.0
    %778 = vmatprep.subr.mxu0 0.0
    %779 = vmatpush1.msra.mxu0 0.0
    %780 = vmatprep.subr.mxu0 0.0
    %781 = vmatpush1.msra.mxu0 0.0
    %782 = vmatprep.subr.mxu0 0.0
    %783 = vmatpush1.msra.mxu0 0.0
    %784 = vmatprep.subr.mxu0 0.0
    %785 = vmatpush1.msra.mxu0 0.0
    %786 = vmatprep.subr.mxu0 0.0
    %787 = vmatpush1.msra.mxu0 0.0
    %788 = vmatprep.subr.mxu0 %v767
    %789 = vmatpush1.msra.mxu0 %v766
    %790 = vmatprep.subr.mxu0 %v751
    %791 = vmatpush1.msra.mxu0 %v750
    %792 = vmatprep.subr.mxu0 %v735
    %793 = vmatpush1.msra.mxu0 %v734
    %794 = vmatprep.subr.mxu0 %v719
    %795 = vmatpush1.msra.mxu0 %v718
    %796 = vmatprep.subr.mxu0 %v638
    %797 = vmatpush1.msra.mxu0 %v637
    %798 = vmatprep.subr.mxu0 %v703
    %799 = vmatpush1.msra.mxu0 %v702
    %800 = vmatprep.subr.mxu0 %v687
    %801 = vmatpush1.msra.mxu0 %v686
    %802 = vmatprep.subr.mxu0 %v671
    %803 = vmatpush1.msra.mxu0 %v670
    %804 = vmatprep.subr.mxu0 %v655
    %805 = vmatpush1.msra.mxu0 %v654
    %806 = vmatprep.subr.mxu0 0.0
    %807 = vmatpush2.msra.mxu0 0.0
    %808 = vmatprep.subr.mxu0 0.0
    %809 = vmatpush2.msra.mxu0 0.0
    %810 = vmatprep.subr.mxu0 0.0
    %811 = vmatpush2.msra.mxu0 0.0
    %812 = vmatprep.subr.mxu0 0.0
    %813 = vmatpush2.msra.mxu0 0.0
    %814 = vmatprep.subr.mxu0 0.0
    %815 = vmatpush2.msra.mxu0 0.0
    %816 = vmatprep.subr.mxu0 0.0
    %817 = vmatpush2.msra.mxu0 0.0
    %818 = vmatprep.subr.mxu0 0.0
    %819 = vmatpush2.msra.mxu0 0.0
    %820 = vmatprep.subr.mxu0 0.0
    %821 = vmatpush2.msra.mxu0 0.0
    %822 = vmatprep.subr.mxu0 0.0
    %823 = vmatpush2.msra.mxu0 0.0
    %824 = vmatprep.subr.mxu0 0.0
    %825 = vmatpush2.msra.mxu0 0.0
    %826 = vmatprep.subr.mxu0 0.0
    %827 = vmatpush2.msra.mxu0 0.0
    %828 = vmatprep.subr.mxu0 0.0
    %829 = vmatpush2.msra.mxu0 0.0
    %830 = vmatprep.subr.mxu0 0.0
    %831 = vmatpush2.msra.mxu0 0.0
    %832 = vmatprep.subr.mxu0 0.0
    %833 = vmatpush2.msra.mxu0 0.0
    %834 = vmatprep.subr.mxu0 0.0
    %835 = vmatpush2.msra.mxu0 0.0
    %836 = vmatprep.subr.mxu0 0.0
    %837 = vmatpush2.msra.mxu0 0.0
    %838 = vmatprep.mubr.f32.mxu0 0.0
    %839 = vmatmul.mubr.f32.gmra.mxu0 %v772
    %v840 = vpop.f32.mrf.mxu0
    %v841 = vadd.f32 0.0, %v840
    %v842 = vpop.f32.mrf.mxu0
    %v843 = vadd.f32 0.0, %v842
    %844 = vdwg.mxu0
    %845 = vmatprep.subr.mxu0 0.0
    %846 = vmatpush1.msra.mxu0 0.0
    %847 = vmatprep.subr.mxu0 0.0
    %848 = vmatpush1.msra.mxu0 0.0
    %849 = vmatprep.subr.mxu0 0.0
    %850 = vmatpush1.msra.mxu0 0.0
    %851 = vmatprep.subr.mxu0 0.0
    %852 = vmatpush1.msra.mxu0 0.0
    %853 = vmatprep.subr.mxu0 0.0
    %854 = vmatpush1.msra.mxu0 0.0
    %855 = vmatprep.subr.mxu0 0.0
    %856 = vmatpush1.msra.mxu0 0.0
    %857 = vmatprep.subr.mxu0 0.0
    %858 = vmatpush1.msra.mxu0 0.0
    %859 = vmatprep.subr.mxu0 %v769
    %860 = vmatpush1.msra.mxu0 %v768
    %861 = vmatprep.subr.mxu0 %v753
    %862 = vmatpush1.msra.mxu0 %v752
    %863 = vmatprep.subr.mxu0 %v737
    %864 = vmatpush1.msra.mxu0 %v736
    %865 = vmatprep.subr.mxu0 %v721
    %866 = vmatpush1.msra.mxu0 %v720
    %867 = vmatprep.subr.mxu0 %v640
    %868 = vmatpush1.msra.mxu0 %v639
    %869 = vmatprep.subr.mxu0 %v705
    %870 = vmatpush1.msra.mxu0 %v704
    %871 = vmatprep.subr.mxu0 %v689
    %872 = vmatpush1.msra.mxu0 %v688
    %873 = vmatprep.subr.mxu0 %v673
    %874 = vmatpush1.msra.mxu0 %v672
    %875 = vmatprep.subr.mxu0 %v657
    %876 = vmatpush1.msra.mxu0 %v656
    %877 = vmatprep.subr.mxu0 0.0
    %878 = vmatpush2.msra.mxu0 0.0
    %879 = vmatprep.subr.mxu0 0.0
    %880 = vmatpush2.msra.mxu0 0.0
    %881 = vmatprep.subr.mxu0 0.0
    %882 = vmatpush2.msra.mxu0 0.0
    %883 = vmatprep.subr.mxu0 0.0
    %884 = vmatpush2.msra.mxu0 0.0
    %885 = vmatprep.subr.mxu0 0.0
    %886 = vmatpush2.msra.mxu0 0.0
    %887 = vmatprep.subr.mxu0 0.0
    %888 = vmatpush2.msra.mxu0 0.0
    %889 = vmatprep.subr.mxu0 0.0
    %890 = vmatpush2.msra.mxu0 0.0
    %891 = vmatprep.subr.mxu0 0.0
    %892 = vmatpush2.msra.mxu0 0.0
    %893 = vmatprep.subr.mxu0 0.0
    %894 = vmatpush2.msra.mxu0 0.0
    %895 = vmatprep.subr.mxu0 0.0
    %896 = vmatpush2.msra.mxu0 0.0
    %897 = vmatprep.subr.mxu0 0.0
    %898 = vmatpush2.msra.mxu0 0.0
    %899 = vmatprep.subr.mxu0 0.0
    %900 = vmatpush2.msra.mxu0 0.0
    %901 = vmatprep.subr.mxu0 0.0
    %902 = vmatpush2.msra.mxu0 0.0
    %903 = vmatprep.subr.mxu0 0.0
    %904 = vmatpush2.msra.mxu0 0.0
    %905 = vmatprep.subr.mxu0 0.0
    %906 = vmatpush2.msra.mxu0 0.0
    %907 = vmatprep.subr.mxu0 0.0
    %908 = vmatpush2.msra.mxu0 0.0
    %909 = vmatprep.mubr.f32.mxu0 0.0
    %910 = vmatmul.mubr.f32.gmra.mxu0 %v772
    %v911 = vpop.f32.mrf.mxu0
    %v912 = vadd.f32 0.0, %v911
    %v913 = vpop.f32.mrf.mxu0
    %v914 = vadd.f32 0.0, %v913
    %915 = vdwg.mxu0
    %v916 = vld [vmem:[%s5] sm:$0xff]
    %v917 = vld [vmem:[%s6] sm:$0xff]
    %v918 = vadd.f32 %v841, %v843
    %919 = vadd.xlane.f32.xlu0 %v918
    %v920 = vpop.xlane.xlu0 %919
    %v921 = vrot.slane %v920, 4
    %v922 = vadd.f32 %v920, %v921
    %v923 = vrot.slane %v922, 2
    %v924 = vadd.f32 %v922, %v923
    %v925 = vrot.slane %v924, 1
    %v926 = vadd.f32 %v924, %v925
    %s927 = vtos %v926
    %v928 = vstv %s927
    %v929 = vmul.f32 %v928, %v521
    %v930 = vmul.f32 %v841, %v841
    %v931 = vmul.f32 %v843, %v843
    %v932 = vadd.f32 %v930, %v931
    %933 = vadd.xlane.f32.xlu0 %v932
    %v934 = vpop.xlane.xlu0 %933
    %v935 = vrot.slane %v934, 4
    %v936 = vadd.f32 %v934, %v935
    %v937 = vrot.slane %v936, 2
    %v938 = vadd.f32 %v936, %v937
    %v939 = vrot.slane %v938, 1
    %v940 = vadd.f32 %v938, %v939
    %s941 = vtos %v940
    %v942 = vstv %s941
    %v943 = vmul.f32 %v942, %v521
    %v944 = vmul.f32 %v929, %v929
    %v945 = vsub.f32 %v943, %v944
    %v946 = vadd.f32 %v945, 1e-05
    %v947 = vrsqrt.pop %v946
    %v948 = vmul.f32 %v947, %v916
    %v949 = vmul.f32 %v929, %v948
    %v950 = vsub.f32 %v917, %v949
    %952 = vset.pattern.permute.xlu0 0
    %953 = vperm.xlu0 %952, %v948
    %v954 = vpop.permute.xlu0 %953
    %v956 = vmul.f32 %v841, %v954
    %v957 = vmul.f32 %v843, %v954
    %959 = vset.pattern.permute.xlu0 0
    %960 = vperm.xlu0 %959, %v950
    %v961 = vpop.permute.xlu0 %960
    %v963 = vadd.f32 %v956, %v961
    %v964 = vadd.f32 %v957, %v961
    %v965 = vadd.f32 %v912, %v914
    %966 = vadd.xlane.f32.xlu0 %v965
    %v967 = vpop.xlane.xlu0 %966
    %v968 = vrot.slane %v967, 4
    %v969 = vadd.f32 %v967, %v968
    %v970 = vrot.slane %v969, 2
    %v971 = vadd.f32 %v969, %v970
    %v972 = vrot.slane %v971, 1
    %v973 = vadd.f32 %v971, %v972
    %s974 = vtos %v973
    %v975 = vstv %s974
    %v976 = vmul.f32 %v975, %v521
    %v977 = vmul.f32 %v912, %v912
    %v978 = vmul.f32 %v914, %v914
    %v979 = vadd.f32 %v977, %v978
    %980 = vadd.xlane.f32.xlu0 %v979
    %v981 = vpop.xlane.xlu0 %980
    %v982 = vrot.slane %v981, 4
    %v983 = vadd.f32 %v981, %v982
    %v984 = vrot.slane %v983, 2
    %v985 = vadd.f32 %v983, %v984
    %v986 = vrot.slane %v985, 1
    %v987 = vadd.f32 %v985, %v986
    %s988 = vtos %v987
    %v989 = vstv %s988
    %v990 = vmul.f32 %v989, %v521
    %v991 = vmul.f32 %v976, %v976
    %v992 = vsub.f32 %v990, %v991
    %v993 = vadd.f32 %v992, 1e-05
    %v994 = vrsqrt.pop %v993
    %v995 = vmul.f32 %v994, %v916
    %v996 = vmul.f32 %v976, %v995
    %v997 = vsub.f32 %v917, %v996
    %999 = vset.pattern.permute.xlu0 0
    %1000 = vperm.xlu0 %999, %v995
    %v1001 = vpop.permute.xlu0 %1000
    %v1003 = vmul.f32 %v912, %v1001
    %v1004 = vmul.f32 %v914, %v1001
    %1006 = vset.pattern.permute.xlu0 0
    %1007 = vperm.xlu0 %1006, %v997
    %v1008 = vpop.permute.xlu0 %1007
    %v1010 = vadd.f32 %v1003, %v1008
    %v1011 = vadd.f32 %v1004, %v1008
    %1012 = vst [vmem:[#allocation2] sm:$0xff] %v963
    %1013 = vst [vmem:[#allocation2 + $0x8] sm:$0xff] %v964
    %1014 = vst [vmem:[#allocation2 + $0x10] sm:$0xff] %v1010
    %1015 = vst [vmem:[#allocation2 + $0x18] sm:$0xff] %v1011
    // Predicated region
    $region30: #{tpu_custom_call.1} parent=1 // pred_check
      _
    $region31: #{tpu_custom_call.1} parent=1 // pred_check_branch
      %1017 = sbr.rel (0) target = $region33
    $region32: #{tpu_custom_call.1} parent=1 // pred_region
      %s1019 = ssub.s32 512, 512
      %1020 = vsyncadd [#allocation3], %s1019
      %s1022 = sshll.u32 [#allocation2], 4
      %s1023 = int_to_ptr.vmem [resolvable:$true] %s1022
      %1025 = dma.vmem_to_hbm [thread:$0]  %s1023, 512, %s7, [#allocation3]
    $region33: #{tpu_custom_call.1} parent=1 // pred_fallthru
      _
    // Predicated region
    $region34: #{tpu_custom_call.1} parent=1 // pred_check
      _
    $region35: #{tpu_custom_call.1} parent=1 // pred_check_branch
      %1027 = sbr.rel (0) target = $region37
    $region36: #{tpu_custom_call.1} parent=1 // pred_region
      %1028 = dma.done [#allocation3], 512
    $region37: #{tpu_custom_call.1} parent=1 // pred_fallthru
      _
    %1029 = vsyncpa [#allocation3], 1

</llo_original>
